<compile_context>
chip_gen: v7x
topology: tpu7x:2x2x1
jax: 0.10.0
libtpu: 0.0.40
codegen_flags: <defaults>
</compile_context>

<pallas_src>
import jax
import jax.numpy as jnp
from jax.experimental import pallas as pl
from jax.experimental.pallas import tpu as pltpu


def _identity_kernel(x_ref, o_ref):
    # Straight copy of the current VMEM tile (vld -> vst, no compute).
    o_ref[...] = x_ref[...]


_LANE_CANDIDATES = (8192, 4096, 2048, 1024, 512, 256, 128)  # lane-dense widths
_TARGET_TILE_BYTES = 2 * 1024 * 1024                        # per-buffer tile budget


def identity(x: jax.Array, *, in_place: bool = False) -> jax.Array:
    """Identity forward pass implemented as a Pallas TPU kernel."""
    orig_shape = x.shape
    dtype = x.dtype
    total = x.size

    if total == 0:
        return x  # nothing to move

    # ---- lane-dense 2D view: (-1, L) with L a large multiple of 128 -------
    lane = None
    for cand in _LANE_CANDIDATES:
        if total % cand == 0:
            lane = cand
            break
    if lane is None:
        # Fallback: keep the trailing dim (full-extent lane block is legal
        # even when it is not a multiple of 128).
        lane = orig_shape[-1] if x.ndim >= 2 else total
    x2 = x.reshape(-1, lane)
    R, C = x2.shape

    # ---- byte-targeted row tiling (multiple of 8 sublanes, cdiv grid) -----
    itemsize = jnp.dtype(dtype).itemsize
    rows_per_tile = max(1, _TARGET_TILE_BYTES // (C * itemsize))
    if rows_per_tile >= R:
        tr = R                                    # whole array fits one tile
    else:
        tr = min(R, max(8, (rows_per_tile // 8) * 8))
    grid = (pl.cdiv(R, tr),)

    # Optional buffer-donation path (caller must donate x for it to pay off).
    extra = {"input_output_aliases": {0: 0}} if in_place else {}

    out2 = pl.pallas_call(
        _identity_kernel,
        out_shape=jax.ShapeDtypeStruct((R, C), dtype),
        grid=grid,
        in_specs=[pl.BlockSpec((tr, C), lambda i: (i, 0))],
        out_specs=pl.BlockSpec((tr, C), lambda i: (i, 0)),
        compiler_params=pltpu.CompilerParams(
            dimension_semantics=("parallel",),
        ),
        cost_estimate=pl.CostEstimate(
            flops=0,
            transcendentals=0,
            bytes_accessed=2 * total * itemsize,
        ),
        **extra,
    )(x2)

    return out2.reshape(orig_shape)


if __name__ == "__main__":
    key = jax.random.PRNGKey(0)
    # NCHW conv-style input: batch=2, channels=4, 16x16 spatial.
    x = jax.random.normal(key, (2, 4, 16, 16), dtype=jnp.float32)

    y = identity(x)
    jax.block_until_ready(y)

    assert y.shape == x.shape, (y.shape, x.shape)
    assert y.dtype == x.dtype, (y.dtype, x.dtype)
    assert bool(jnp.array_equal(y, x)), "Identity kernel output does not match input"

    print("KERNEL_OK")
</pallas_src>

<mosaic_0001>
module attributes {stable_mosaic.version = 11 : i64} {
  func.func @_identity_kernel(%arg0: i32, %arg1: memref<1x2048xf32, #tpu.memory_space<vmem>>, %arg2: memref<1x2048xf32, #tpu.memory_space<vmem>>) attributes {dimension_semantics = [#tpu.dimension_semantics<parallel>], iteration_bounds = array<i64: 1>, scalar_prefetch = 0 : i64, scratch_operands = 0 : i64, tpu.core_type = #tpu.core_type<tc>, window_params = [{transform_indices = @transform_0, window_bounds = array<i64: 1, 2048>}, {transform_indices = @transform_1, window_bounds = array<i64: 1, 2048>}]} {
    %c0 = arith.constant 0 : index
    %c0_0 = arith.constant 0 : index
    %0 = vector.load %arg1[%c0, %c0_0] : memref<1x2048xf32, #tpu.memory_space<vmem>>, vector<1x2048xf32>
    %c0_1 = arith.constant 0 : index
    %c0_2 = arith.constant 0 : index
    %1 = vector.load %arg2[%c0_1, %c0_2] : memref<1x2048xf32, #tpu.memory_space<vmem>>, vector<1x2048xf32>
    tpu.vector_store %arg2[%c0_1, %c0_2], %0 {strides = array<i32>} : memref<1x2048xf32, #tpu.memory_space<vmem>>, vector<1x2048xf32>,
    return
  }
  func.func @transform_0(%arg0: i32) -> (i32, i32) {
    %c0_i32 = arith.constant 0 : i32
    %c0_i32_0 = arith.constant 0 : i32
    return %arg0, %c0_i32 : i32, i32
  }
  func.func @transform_1(%arg0: i32) -> (i32, i32) {
    %c0_i32 = arith.constant 0 : i32
    %c0_i32_0 = arith.constant 0 : i32
    return %arg0, %c0_i32 : i32, i32
  }
}

</mosaic_0001>

<llo_original>
// kernel: tpu_custom_call.1
$region0: #{tpu_custom_call.1}
  #allocation0 [shape = 'u32[]', space=smem, size = 0x4, offset = 0x4, fixed_abs, tag = 'smem constant byte address 0x4 - core index']
  #allocation1 [shape = 'u32[144,128]{1,0:T(1,128)}', space=vmem, size = 0x12000, scoped, tag = 'internal scratch']
  %s0 = inlined_call_operand.hbm [shape: f32[1,2048], index: 0, kind: input, shape index: {}]
  %s1 = inlined_call_operand.hbm [shape: f32[1,2048], index: 1, kind: output, shape index: {}]
  %s2 = sld [smem:[#allocation0]]
  $region18: #{tpu_custom_call.1} parent=0
    _
  %s4 = ssub.s32 1, %s2
  %s5 = scalar_select 0, %s4, %s2
  $region1: #{tpu_custom_call.1} parent=0
    #allocation2 [shape = 'u8[8192]{0}', space=vmem, size = 0x2000, scoped, tag = 'input window, operand 0, single buffered']
    #allocation3 [shape = 's32[1]{0}', space=sflag, size = 0x4, scoped, tag = 'scoped memory for tpu_custom_call.1']
    #allocation4 [shape = 's32[1]{0}', space=sflag, size = 0x4, scoped, tag = 'scoped memory for tpu_custom_call.1']
    #allocation5 [shape = 'u8[8192]{0}', space=vmem, size = 0x2000, scoped, tag = 'output window, operand 0, single buffered']
    %6 = vsyncpa [#allocation3], 0
    %7 = vsyncpa [#allocation4], 0
    // Predicated region
    $region2: #{tpu_custom_call.1} parent=1 // pred_check
      _
    $region3: #{tpu_custom_call.1} parent=1 // pred_check_branch
      %9 = sbr.rel (0) target = $region5
    $region4: #{tpu_custom_call.1} parent=1 // pred_region
      %s11 = ssub.s32 256, 256
      %12 = vsyncadd [#allocation3], %s11
      %s14 = sshll.u32 [#allocation2], 4
      %s15 = int_to_ptr.vmem [resolvable:$true] %s14
      %17 = dma.hbm_to_vmem [thread:$0]  %s0, 256, %s15, [#allocation3]
    $region5: #{tpu_custom_call.1} parent=1 // pred_fallthru
      _
    // Predicated region
    $region6: #{tpu_custom_call.1} parent=1 // pred_check
      _
    $region7: #{tpu_custom_call.1} parent=1 // pred_check_branch
      %19 = sbr.rel (0) target = $region9
    $region8: #{tpu_custom_call.1} parent=1 // pred_region
      %20 = dma.done [#allocation3], 256
    $region9: #{tpu_custom_call.1} parent=1 // pred_fallthru
      _
    %v21 = vld [vmem:[#allocation2] sm:$0xff]
    %v22 = vld [vmem:[#allocation2 + $0x8] sm:$0xff]
    %23 = vst [vmem:[#allocation5] sm:$0xff] %v21
    %24 = vst [vmem:[#allocation5 + $0x8] sm:$0xff] %v22
    // Predicated region
    $region10: #{tpu_custom_call.1} parent=1 // pred_check
      _
    $region11: #{tpu_custom_call.1} parent=1 // pred_check_branch
      %26 = sbr.rel (0) target = $region13
    $region12: #{tpu_custom_call.1} parent=1 // pred_region
      %s28 = ssub.s32 256, 256
      %29 = vsyncadd [#allocation4], %s28
      %s31 = sshll.u32 [#allocation5], 4
      %s32 = int_to_ptr.vmem [resolvable:$true] %s31
      %34 = dma.vmem_to_hbm [thread:$0]  %s32, 256, %s1, [#allocation4]
    $region13: #{tpu_custom_call.1} parent=1 // pred_fallthru
      _
    // Predicated region
    $region14: #{tpu_custom_call.1} parent=1 // pred_check
      _
    $region15: #{tpu_custom_call.1} parent=1 // pred_check_branch
      %36 = sbr.rel (0) target = $region17
    $region16: #{tpu_custom_call.1} parent=1 // pred_region
      %37 = dma.done [#allocation4], 256
    $region17: #{tpu_custom_call.1} parent=1 // pred_fallthru
      _
    %38 = vsyncpa [#allocation3], 1
    %39 = vsyncpa [#allocation4], 1

</llo_original>
